<compile_context>
chip_gen: v5e
topology: v5e:2x2
jax: 0.10.0
libtpu: 0.0.40
codegen_flags: <defaults>
</compile_context>

<pallas_src>
import functools

import jax
import jax.numpy as jnp
from jax import lax
from jax.experimental import pallas as pl
from jax.experimental.pallas import tpu as pltpu

K = 7    # conv kernel size
PAD = 3  # conv padding

_DEFAULT_VMEM_LIMIT = 48 * 1024 * 1024   # stays under v7x's 64 MiB physical VMEM


# ---------------------------------------------------------------------------
# Small layout helpers (operate only on tiny (H, W)-sized spatial maps).
# ---------------------------------------------------------------------------
def _to_hw(v, H, W):
    """(1, H*W) -> (H, W)."""
    if W % 128 == 0:
        return v.reshape(H, W)            # lane-aligned widths: native reshape
    # TODO(synk): non-128-multiple W falls back to O(H) lane slices on a tiny
    # map; prefer lane-aligned W for production FPN sizes.
    return jnp.concatenate([v[:, i * W:(i + 1) * W] for i in range(H)], axis=0)


def _to_flat(m, H, W):
    """(H, W) -> (1, H*W)."""
    if W % 128 == 0:
        return m.reshape(1, H * W)
    return jnp.concatenate([m[i:i + 1, :] for i in range(H)], axis=1)


def _gate_flat(mx, av, band, H, W):
    """7x7 / pad-3 conv over the two (1, H*W) maps + sigmoid, as ONE MXU matmul.

    LHS is the lane-concatenation of the 2*K row-shifted, row-padded maps
    (shape (H, 2*K*W)); `band` is the matching stack of banded weight matrices
    (shape (2*K*W, W)) with the column shift / zero column-padding folded in.
    Returns the flattened sigmoid gate, shape (1, H*W), f32.
    """
    zrow = jnp.zeros((PAD, W), jnp.float32)
    padded = [jnp.concatenate([zrow, _to_hw(m, H, W), zrow], axis=0)
              for m in (mx, av)]                             # 2 x (H+2*PAD, W)
    lhs = jnp.concatenate(
        [padded[c][di:di + H, :] for c in range(2) for di in range(K)],
        axis=1)                                              # (H, 2*K*W)
    acc = jnp.dot(lhs, band, preferred_element_type=jnp.float32)   # (H, W)
    return _to_flat(jax.nn.sigmoid(acc), H, W)


# ---------------------------------------------------------------------------
# Kernels.
# ---------------------------------------------------------------------------
def sam_fused_kernel(x_ref, band_ref, o_ref, *, H, W):
    """Single pass: one batch element, all channels resident, lane-dense."""
    C = x_ref.shape[1]
    x = x_ref[0].astype(jnp.float32)                         # (C, H*W)
    mx = jnp.max(x, axis=0, keepdims=True)                   # (1, H*W)
    av = jnp.sum(x, axis=0, keepdims=True) * (1.0 / C)       # (1, H*W)
    gate = _gate_flat(mx, av, band_ref[...], H, W)
    o_ref[0] = (x * gate).astype(o_ref.dtype)


def sam_gate_kernel(x_ref, band_ref, gate_ref, mx_sc, sum_sc, *, H, W, C_total):
    """Two-pass, pass 1: reduce max/sum over C tiles, emit gate at last tile."""
    cb = pl.program_id(1)
    x = x_ref[0].astype(jnp.float32)                         # (Cblk, H*W)

    @pl.when(cb == 0)
    def _():
        mx_sc[...] = jnp.full(mx_sc.shape, -jnp.inf, dtype=mx_sc.dtype)
        sum_sc[...] = jnp.zeros(sum_sc.shape, dtype=sum_sc.dtype)

    mx_sc[...] = jnp.maximum(mx_sc[...], jnp.max(x, axis=0, keepdims=True))
    sum_sc[...] = sum_sc[...] + jnp.sum(x, axis=0, keepdims=True)

    @pl.when(cb == pl.num_programs(1) - 1)
    def _():
        av = sum_sc[...] * (1.0 / C_total)
        gate_ref[0] = _gate_flat(mx_sc[...], av, band_ref[...], H, W)


def sam_apply_kernel(x_ref, gate_ref, o_ref):
    """Two-pass, pass 2: x * gate (gate broadcast over channels)."""
    o_ref[0] = (x_ref[0].astype(jnp.float32) * gate_ref[0]).astype(o_ref.dtype)


# ---------------------------------------------------------------------------
# Wrapper.
# ---------------------------------------------------------------------------
def _build_banded_weights(w, W):
    """w: (1, 2, K, K) OIHW -> (2*K*W, W) stacked banded matrices (f32).

    Block (c, di) has B[j + dj - PAD, j] = w[0, c, di, dj]; entries whose row
    index falls outside [0, W) are dropped, which implements the zero column
    padding of the convolution.
    """
    w2 = w.reshape(2, K, K).astype(jnp.float32)
    blocks = []
    for c in range(2):
        for di in range(K):
            b = jnp.zeros((W, W), jnp.float32)
            for dj in range(K):
                b = b + w2[c, di, dj] * jnp.eye(W, W, k=PAD - dj,
                                                dtype=jnp.float32)
            blocks.append(b)
    return jnp.concatenate(blocks, axis=0)                   # (2*K*W, W)


def _pick_c_block(C, block_budget_bytes, hw_bytes):
    """Largest sublane-aligned divisor of C whose (Cblk, H*W) block fits."""
    cands = [d for d in range(C, 0, -1) if C % d == 0 and (d % 8 == 0 or d == C)]
    for d in cands:
        if d * hw_bytes <= block_budget_bytes:
            return d
    return cands[-1]    # best effort: smallest aligned divisor


def _sam_fused(x_flat, band, H, W, vmem_limit_bytes):
    N, C, HW = x_flat.shape
    itemsize = int(jnp.dtype(x_flat.dtype).itemsize)
    kernel = functools.partial(sam_fused_kernel, H=H, W=W)
    cost = pl.CostEstimate(
        flops=int(N * (2 * H * (2 * K * W) * W + 4 * C * HW)),
        transcendentals=int(N * HW),
        bytes_accessed=int(2 * N * C * HW * itemsize + band.size * 4),
    )
    return pl.pallas_call(
        kernel,
        out_shape=jax.ShapeDtypeStruct((N, C, HW), x_flat.dtype),
        grid_spec=pltpu.PrefetchScalarGridSpec(
            num_scalar_prefetch=0,
            grid=(N,),
            in_specs=[
                pl.BlockSpec((1, C, HW), lambda n: (n, 0, 0)),
                pl.BlockSpec(band.shape, lambda n: (0, 0)),
            ],
            out_specs=pl.BlockSpec((1, C, HW), lambda n: (n, 0, 0)),
        ),
        compiler_params=pltpu.CompilerParams(
            dimension_semantics=("parallel",),
            vmem_limit_bytes=vmem_limit_bytes,
        ),
        cost_estimate=cost,
    )(x_flat, band)


def _sam_two_pass(x_flat, band, H, W, c_block, vmem_limit_bytes):
    N, C, HW = x_flat.shape
    itemsize = int(jnp.dtype(x_flat.dtype).itemsize)
    ncb = C // c_block

    # Pass 1: channel max/sum reduction (C axis "arbitrary") -> sigmoid gate.
    gate_kernel = functools.partial(sam_gate_kernel, H=H, W=W, C_total=C)
    gate = pl.pallas_call(
        gate_kernel,
        out_shape=jax.ShapeDtypeStruct((N, 1, HW), jnp.float32),
        grid_spec=pltpu.PrefetchScalarGridSpec(
            num_scalar_prefetch=0,
            grid=(N, ncb),
            in_specs=[
                pl.BlockSpec((1, c_block, HW), lambda n, c: (n, c, 0)),
                pl.BlockSpec(band.shape, lambda n, c: (0, 0)),
            ],
            out_specs=pl.BlockSpec((1, 1, HW), lambda n, c: (n, 0, 0)),
            scratch_shapes=[pltpu.VMEM((1, HW), jnp.float32),
                            pltpu.VMEM((1, HW), jnp.float32)],
        ),
        compiler_params=pltpu.CompilerParams(
            dimension_semantics=("parallel", "arbitrary"),
            vmem_limit_bytes=vmem_limit_bytes,
        ),
        cost_estimate=pl.CostEstimate(
            flops=int(N * (2 * H * (2 * K * W) * W + 2 * C * HW)),
            transcendentals=int(N * HW),
            bytes_accessed=int(N * C * HW * itemsize + N * HW * 4
                               + band.size * 4),
        ),
    )(x_flat, band)

    # Pass 2: apply gate to x (all parallel).
    out_flat = pl.pallas_call(
        sam_apply_kernel,
        out_shape=jax.ShapeDtypeStruct((N, C, HW), x_flat.dtype),
        grid_spec=pltpu.PrefetchScalarGridSpec(
            num_scalar_prefetch=0,
            grid=(N, ncb),
            in_specs=[
                pl.BlockSpec((1, c_block, HW), lambda n, c: (n, c, 0)),
                pl.BlockSpec((1, 1, HW), lambda n, c: (n, 0, 0)),
            ],
            out_specs=pl.BlockSpec((1, c_block, HW), lambda n, c: (n, c, 0)),
        ),
        compiler_params=pltpu.CompilerParams(
            dimension_semantics=("parallel", "parallel"),
            vmem_limit_bytes=vmem_limit_bytes,
        ),
        cost_estimate=pl.CostEstimate(
            flops=int(N * C * HW),
            transcendentals=0,
            bytes_accessed=int(2 * N * C * HW * itemsize + N * HW * 4),
        ),
    )(x_flat, gate)
    return out_flat


def sam_pallas(x, w, *, c_block=None, vmem_limit_bytes=_DEFAULT_VMEM_LIMIT):
    """SAM forward.  x: (N, C, H, W), w: (1, 2, 7, 7) OIHW.  Returns (N, C, H, W).

    Auto-selects between a fused single-pass kernel (when one batch element's
    channels fit the VMEM budget) and a C-tiled two-pass structure (for large
    C*H*W on v7x's 64 MiB VMEM / v5e's small scoped limit).  Pass `c_block` to
    force the two-pass path with a given channel tile (must divide C).
    """
    N, C, H, W = x.shape
    HW = H * W
    itemsize = int(jnp.dtype(x.dtype).itemsize)
    x_flat = x.reshape(N, C, HW)                 # free, contiguous reshape in HBM
    band = _build_banded_weights(w, W)           # (2*K*W, W), stays VMEM-resident
    band_bytes = int(band.size * 4)

    # Live VMEM ~= 2 x (in block + out block) + band + slack.
    usable = max(vmem_limit_bytes - band_bytes - (2 << 20), 4 << 20)
    block_budget = usable // 4

    if c_block is None:
        if C * HW * itemsize <= block_budget:
            out_flat = _sam_fused(x_flat, band, H, W, vmem_limit_bytes)
            return out_flat.reshape(N, C, H, W)
        c_block = _pick_c_block(C, block_budget, HW * itemsize)

    assert C % c_block == 0, "c_block must divide C"
    out_flat = _sam_two_pass(x_flat, band, H, W, c_block, vmem_limit_bytes)
    return out_flat.reshape(N, C, H, W)


def sam_reference(x, w):
    """Plain-JAX reference replicating the PyTorch forward pass."""
    mx = jnp.max(x, axis=1, keepdims=True)
    av = jnp.mean(x, axis=1, keepdims=True)
    concat = jnp.concatenate([mx, av], axis=1)               # (N, 2, H, W)
    conv = lax.conv_general_dilated(
        concat, w,
        window_strides=(1, 1),
        padding=((PAD, PAD), (PAD, PAD)),
        dimension_numbers=("NCHW", "OIHW", "NCHW"),
    )                                                        # (N, 1, H, W)
    return jax.nn.sigmoid(conv) * x


if __name__ == "__main__":
    key = jax.random.PRNGKey(0)
    k_x, k_w, k_x2 = jax.random.split(key, 3)

    # Conv weight: nn.Conv2d(2, 1, 7, bias=False), OIHW, deterministic init.
    fan_in = 2 * K * K
    bound = (1.0 / fan_in) ** 0.5
    w = jax.random.uniform(k_w, (1, 2, K, K), jnp.float32,
                           minval=-bound, maxval=bound)

    # 1) Default (fused single-pass) path at the module's small shape.
    N, C, H, W = 2, 4, 16, 16
    x = jax.random.normal(k_x, (N, C, H, W), dtype=jnp.float32)
    out = jax.block_until_ready(jax.jit(sam_pallas)(x, w))
    ref = sam_reference(x, w)
    assert out.shape == ref.shape == (N, C, H, W)
    assert jnp.allclose(out, ref, rtol=1e-4, atol=1e-4), "fused f32 mismatch"

    # 2) bf16 I/O through the same kernel (compute stays f32, halves HBM bytes).
    out_bf = jax.block_until_ready(jax.jit(sam_pallas)(x.astype(jnp.bfloat16), w))
    assert out_bf.dtype == jnp.bfloat16
    assert jnp.allclose(out_bf.astype(jnp.float32), ref, rtol=5e-2, atol=5e-2), \
        "fused bf16 mismatch"

    # 3) C-tiled two-pass path (what large C*H*W falls back to on v7x / v5e).
    x2 = jax.random.normal(k_x2, (2, 16, 16, 16), dtype=jnp.float32)
    out2 = jax.block_until_ready(
        jax.jit(functools.partial(sam_pallas, c_block=8))(x2, w))
    ref2 = sam_reference(x2, w)
    assert jnp.allclose(out2, ref2, rtol=1e-4, atol=1e-4), "two-pass mismatch"

    print("KERNEL_OK")
</pallas_src>

<mosaic_0001>
module attributes {stable_mosaic.version = 11 : i64} {
  func.func @sam_fused_kernel(%arg0: i32, %arg1: memref<1x4x256xf32, #tpu.memory_space<vmem>>, %arg2: memref<224x16xf32, #tpu.memory_space<vmem>>, %arg3: memref<1x4x256xf32, #tpu.memory_space<vmem>>) attributes {dimension_semantics = [#tpu.dimension_semantics<parallel>], iteration_bounds = array<i64: 2>, scalar_prefetch = 0 : i64, scratch_operands = 0 : i64, tpu.core_type = #tpu.core_type<tc>, window_params = [{transform_indices = @transform_0, window_bounds = array<i64: 1, 4, 256>}, {pipeline_mode = #tpu.pipeline_mode<synchronous>, transform_indices = @transform_1, window_bounds = array<i64: 224, 16>}, {transform_indices = @transform_2, window_bounds = array<i64: 1, 4, 256>}]} {
    %c0 = arith.constant 0 : index
    %c0_0 = arith.constant 0 : index
    %c0_1 = arith.constant 0 : index
    %0 = vector.load %arg1[%c0, %c0_0, %c0_1] : memref<1x4x256xf32, #tpu.memory_space<vmem>>, vector<1x4x256xf32>
    %1 = vector.shape_cast %0 : vector<1x4x256xf32> to vector<4x256xf32>
    %cst = arith.constant dense<0xFF800000> : vector<256xf32>
    %2 = vector.multi_reduction <maximumf>, %1, %cst [0] : vector<4x256xf32> to vector<256xf32>
    %3 = vector.shape_cast %2 : vector<256xf32> to vector<1x256xf32>
    %cst_2 = arith.constant dense<0.000000e+00> : vector<256xf32>
    %4 = vector.multi_reduction <add>, %1, %cst_2 [0] : vector<4x256xf32> to vector<256xf32>
    %5 = vector.shape_cast %4 : vector<256xf32> to vector<1x256xf32>
    %cst_3 = arith.constant 2.500000e-01 : f32
    %6 = vector.broadcast %cst_3 : f32 to vector<1x256xf32>
    %7 = arith.mulf %5, %6 : vector<1x256xf32>
    %c0_4 = arith.constant 0 : index
    %c0_5 = arith.constant 0 : index
    %8 = vector.load %arg2[%c0_4, %c0_5] : memref<224x16xf32, #tpu.memory_space<vmem>>, vector<224x16xf32>
    %cst_6 = arith.constant 0.000000e+00 : f32
    %9 = vector.broadcast %cst_6 : f32 to vector<3x16xf32>
    %10 = vector.extract_strided_slice %3 {offsets = [0, 0], sizes = [1, 16], strides = [1, 1]} : vector<1x256xf32> to vector<1x16xf32>
    %11 = vector.extract_strided_slice %3 {offsets = [0, 16], sizes = [1, 16], strides = [1, 1]} : vector<1x256xf32> to vector<1x16xf32>
    %12 = vector.extract_strided_slice %3 {offsets = [0, 32], sizes = [1, 16], strides = [1, 1]} : vector<1x256xf32> to vector<1x16xf32>
    %13 = vector.extract_strided_slice %3 {offsets = [0, 48], sizes = [1, 16], strides = [1, 1]} : vector<1x256xf32> to vector<1x16xf32>
    %14 = vector.extract_strided_slice %3 {offsets = [0, 64], sizes = [1, 16], strides = [1, 1]} : vector<1x256xf32> to vector<1x16xf32>
    %15 = vector.extract_strided_slice %3 {offsets = [0, 80], sizes = [1, 16], strides = [1, 1]} : vector<1x256xf32> to vector<1x16xf32>
    %16 = vector.extract_strided_slice %3 {offsets = [0, 96], sizes = [1, 16], strides = [1, 1]} : vector<1x256xf32> to vector<1x16xf32>
    %17 = vector.extract_strided_slice %3 {offsets = [0, 112], sizes = [1, 16], strides = [1, 1]} : vector<1x256xf32> to vector<1x16xf32>
    %18 = vector.extract_strided_slice %3 {offsets = [0, 128], sizes = [1, 16], strides = [1, 1]} : vector<1x256xf32> to vector<1x16xf32>
    %19 = vector.extract_strided_slice %3 {offsets = [0, 144], sizes = [1, 16], strides = [1, 1]} : vector<1x256xf32> to vector<1x16xf32>
    %20 = vector.extract_strided_slice %3 {offsets = [0, 160], sizes = [1, 16], strides = [1, 1]} : vector<1x256xf32> to vector<1x16xf32>
    %21 = vector.extract_strided_slice %3 {offsets = [0, 176], sizes = [1, 16], strides = [1, 1]} : vector<1x256xf32> to vector<1x16xf32>
    %22 = vector.extract_strided_slice %3 {offsets = [0, 192], sizes = [1, 16], strides = [1, 1]} : vector<1x256xf32> to vector<1x16xf32>
    %23 = vector.extract_strided_slice %3 {offsets = [0, 208], sizes = [1, 16], strides = [1, 1]} : vector<1x256xf32> to vector<1x16xf32>
    %24 = vector.extract_strided_slice %3 {offsets = [0, 224], sizes = [1, 16], strides = [1, 1]} : vector<1x256xf32> to vector<1x16xf32>
    %25 = vector.extract_strided_slice %3 {offsets = [0, 240], sizes = [1, 16], strides = [1, 1]} : vector<1x256xf32> to vector<1x16xf32>
    %26 = tpu.concatenate %10, %11, %12, %13, %14, %15, %16, %17, %18, %19, %20, %21, %22, %23, %24, %25 in 0 : vector<1x16xf32>, vector<1x16xf32>, vector<1x16xf32>, vector<1x16xf32>, vector<1x16xf32>, vector<1x16xf32>, vector<1x16xf32>, vector<1x16xf32>, vector<1x16xf32>, vector<1x16xf32>, vector<1x16xf32>, vector<1x16xf32>, vector<1x16xf32>, vector<1x16xf32>, vector<1x16xf32>, vector<1x16xf32> -> vector<16x16xf32>
    %27 = tpu.concatenate %9, %26, %9 in 0 : vector<3x16xf32>, vector<16x16xf32>, vector<3x16xf32> -> vector<22x16xf32>
    %28 = vector.extract_strided_slice %7 {offsets = [0, 0], sizes = [1, 16], strides = [1, 1]} : vector<1x256xf32> to vector<1x16xf32>
    %29 = vector.extract_strided_slice %7 {offsets = [0, 16], sizes = [1, 16], strides = [1, 1]} : vector<1x256xf32> to vector<1x16xf32>
    %30 = vector.extract_strided_slice %7 {offsets = [0, 32], sizes = [1, 16], strides = [1, 1]} : vector<1x256xf32> to vector<1x16xf32>
    %31 = vector.extract_strided_slice %7 {offsets = [0, 48], sizes = [1, 16], strides = [1, 1]} : vector<1x256xf32> to vector<1x16xf32>
    %32 = vector.extract_strided_slice %7 {offsets = [0, 64], sizes = [1, 16], strides = [1, 1]} : vector<1x256xf32> to vector<1x16xf32>
    %33 = vector.extract_strided_slice %7 {offsets = [0, 80], sizes = [1, 16], strides = [1, 1]} : vector<1x256xf32> to vector<1x16xf32>
    %34 = vector.extract_strided_slice %7 {offsets = [0, 96], sizes = [1, 16], strides = [1, 1]} : vector<1x256xf32> to vector<1x16xf32>
    %35 = vector.extract_strided_slice %7 {offsets = [0, 112], sizes = [1, 16], strides = [1, 1]} : vector<1x256xf32> to vector<1x16xf32>
    %36 = vector.extract_strided_slice %7 {offsets = [0, 128], sizes = [1, 16], strides = [1, 1]} : vector<1x256xf32> to vector<1x16xf32>
    %37 = vector.extract_strided_slice %7 {offsets = [0, 144], sizes = [1, 16], strides = [1, 1]} : vector<1x256xf32> to vector<1x16xf32>
    %38 = vector.extract_strided_slice %7 {offsets = [0, 160], sizes = [1, 16], strides = [1, 1]} : vector<1x256xf32> to vector<1x16xf32>
    %39 = vector.extract_strided_slice %7 {offsets = [0, 176], sizes = [1, 16], strides = [1, 1]} : vector<1x256xf32> to vector<1x16xf32>
    %40 = vector.extract_strided_slice %7 {offsets = [0, 192], sizes = [1, 16], strides = [1, 1]} : vector<1x256xf32> to vector<1x16xf32>
    %41 = vector.extract_strided_slice %7 {offsets = [0, 208], sizes = [1, 16], strides = [1, 1]} : vector<1x256xf32> to vector<1x16xf32>
    %42 = vector.extract_strided_slice %7 {offsets = [0, 224], sizes = [1, 16], strides = [1, 1]} : vector<1x256xf32> to vector<1x16xf32>
    %43 = vector.extract_strided_slice %7 {offsets = [0, 240], sizes = [1, 16], strides = [1, 1]} : vector<1x256xf32> to vector<1x16xf32>
    %44 = tpu.concatenate %28, %29, %30, %31, %32, %33, %34, %35, %36, %37, %38, %39, %40, %41, %42, %43 in 0 : vector<1x16xf32>, vector<1x16xf32>, vector<1x16xf32>, vector<1x16xf32>, vector<1x16xf32>, vector<1x16xf32>, vector<1x16xf32>, vector<1x16xf32>, vector<1x16xf32>, vector<1x16xf32>, vector<1x16xf32>, vector<1x16xf32>, vector<1x16xf32>, vector<1x16xf32>, vector<1x16xf32>, vector<1x16xf32> -> vector<16x16xf32>
    %45 = tpu.concatenate %9, %44, %9 in 0 : vector<3x16xf32>, vector<16x16xf32>, vector<3x16xf32> -> vector<22x16xf32>
    %46 = vector.extract_strided_slice %27 {offsets = [0, 0], sizes = [16, 16], strides = [1, 1]} : vector<22x16xf32> to vector<16x16xf32>
    %47 = vector.extract_strided_slice %27 {offsets = [1, 0], sizes = [16, 16], strides = [1, 1]} : vector<22x16xf32> to vector<16x16xf32>
    %48 = vector.extract_strided_slice %27 {offsets = [2, 0], sizes = [16, 16], strides = [1, 1]} : vector<22x16xf32> to vector<16x16xf32>
    %49 = vector.extract_strided_slice %27 {offsets = [3, 0], sizes = [16, 16], strides = [1, 1]} : vector<22x16xf32> to vector<16x16xf32>
    %50 = vector.extract_strided_slice %27 {offsets = [4, 0], sizes = [16, 16], strides = [1, 1]} : vector<22x16xf32> to vector<16x16xf32>
    %51 = vector.extract_strided_slice %27 {offsets = [5, 0], sizes = [16, 16], strides = [1, 1]} : vector<22x16xf32> to vector<16x16xf32>
    %52 = vector.extract_strided_slice %27 {offsets = [6, 0], sizes = [16, 16], strides = [1, 1]} : vector<22x16xf32> to vector<16x16xf32>
    %53 = vector.extract_strided_slice %45 {offsets = [0, 0], sizes = [16, 16], strides = [1, 1]} : vector<22x16xf32> to vector<16x16xf32>
    %54 = vector.extract_strided_slice %45 {offsets = [1, 0], sizes = [16, 16], strides = [1, 1]} : vector<22x16xf32> to vector<16x16xf32>
    %55 = vector.extract_strided_slice %45 {offsets = [2, 0], sizes = [16, 16], strides = [1, 1]} : vector<22x16xf32> to vector<16x16xf32>
    %56 = vector.extract_strided_slice %45 {offsets = [3, 0], sizes = [16, 16], strides = [1, 1]} : vector<22x16xf32> to vector<16x16xf32>
    %57 = vector.extract_strided_slice %45 {offsets = [4, 0], sizes = [16, 16], strides = [1, 1]} : vector<22x16xf32> to vector<16x16xf32>
    %58 = vector.extract_strided_slice %45 {offsets = [5, 0], sizes = [16, 16], strides = [1, 1]} : vector<22x16xf32> to vector<16x16xf32>
    %59 = vector.extract_strided_slice %45 {offsets = [6, 0], sizes = [16, 16], strides = [1, 1]} : vector<22x16xf32> to vector<16x16xf32>
    %60 = tpu.concatenate %46, %47, %48, %49, %50, %51, %52, %53, %54, %55, %56, %57, %58, %59 in 1 : vector<16x16xf32>, vector<16x16xf32>, vector<16x16xf32>, vector<16x16xf32>, vector<16x16xf32>, vector<16x16xf32>, vector<16x16xf32>, vector<16x16xf32>, vector<16x16xf32>, vector<16x16xf32>, vector<16x16xf32>, vector<16x16xf32>, vector<16x16xf32>, vector<16x16xf32> -> vector<16x224xf32>
    %cst_7 = arith.constant dense<0.000000e+00> : vector<16x16xf32>
    %61 = tpu.matmul %60, %8, %cst_7 {dimension_numbers = #tpu.dot_dimension_numbers<[1], [0], [0], [1], [0, 0, 1, 1], [], []>} : vector<16x224xf32>, vector<224x16xf32>, vector<16x16xf32> -> vector<16x16xf32>
    %62 = arith.negf %61 : vector<16x16xf32>
    %63 = math.exp %62 : vector<16x16xf32>
    %cst_8 = arith.constant 1.000000e+00 : f32
    %64 = vector.broadcast %cst_8 : f32 to vector<16x16xf32>
    %65 = arith.addf %64, %63 : vector<16x16xf32>
    %66 = arith.divf %64, %65 : vector<16x16xf32>
    %67 = vector.extract_strided_slice %66 {offsets = [0, 0], sizes = [1, 16], strides = [1, 1]} : vector<16x16xf32> to vector<1x16xf32>
    %68 = vector.extract_strided_slice %66 {offsets = [1, 0], sizes = [1, 16], strides = [1, 1]} : vector<16x16xf32> to vector<1x16xf32>
    %69 = vector.extract_strided_slice %66 {offsets = [2, 0], sizes = [1, 16], strides = [1, 1]} : vector<16x16xf32> to vector<1x16xf32>
    %70 = vector.extract_strided_slice %66 {offsets = [3, 0], sizes = [1, 16], strides = [1, 1]} : vector<16x16xf32> to vector<1x16xf32>
    %71 = vector.extract_strided_slice %66 {offsets = [4, 0], sizes = [1, 16], strides = [1, 1]} : vector<16x16xf32> to vector<1x16xf32>
    %72 = vector.extract_strided_slice %66 {offsets = [5, 0], sizes = [1, 16], strides = [1, 1]} : vector<16x16xf32> to vector<1x16xf32>
    %73 = vector.extract_strided_slice %66 {offsets = [6, 0], sizes = [1, 16], strides = [1, 1]} : vector<16x16xf32> to vector<1x16xf32>
    %74 = vector.extract_strided_slice %66 {offsets = [7, 0], sizes = [1, 16], strides = [1, 1]} : vector<16x16xf32> to vector<1x16xf32>
    %75 = vector.extract_strided_slice %66 {offsets = [8, 0], sizes = [1, 16], strides = [1, 1]} : vector<16x16xf32> to vector<1x16xf32>
    %76 = vector.extract_strided_slice %66 {offsets = [9, 0], sizes = [1, 16], strides = [1, 1]} : vector<16x16xf32> to vector<1x16xf32>
    %77 = vector.extract_strided_slice %66 {offsets = [10, 0], sizes = [1, 16], strides = [1, 1]} : vector<16x16xf32> to vector<1x16xf32>
    %78 = vector.extract_strided_slice %66 {offsets = [11, 0], sizes = [1, 16], strides = [1, 1]} : vector<16x16xf32> to vector<1x16xf32>
    %79 = vector.extract_strided_slice %66 {offsets = [12, 0], sizes = [1, 16], strides = [1, 1]} : vector<16x16xf32> to vector<1x16xf32>
    %80 = vector.extract_strided_slice %66 {offsets = [13, 0], sizes = [1, 16], strides = [1, 1]} : vector<16x16xf32> to vector<1x16xf32>
    %81 = vector.extract_strided_slice %66 {offsets = [14, 0], sizes = [1, 16], strides = [1, 1]} : vector<16x16xf32> to vector<1x16xf32>
    %82 = vector.extract_strided_slice %66 {offsets = [15, 0], sizes = [1, 16], strides = [1, 1]} : vector<16x16xf32> to vector<1x16xf32>
    %83 = tpu.concatenate %67, %68, %69, %70, %71, %72, %73, %74, %75, %76, %77, %78, %79, %80, %81, %82 in 1 : vector<1x16xf32>, vector<1x16xf32>, vector<1x16xf32>, vector<1x16xf32>, vector<1x16xf32>, vector<1x16xf32>, vector<1x16xf32>, vector<1x16xf32>, vector<1x16xf32>, vector<1x16xf32>, vector<1x16xf32>, vector<1x16xf32>, vector<1x16xf32>, vector<1x16xf32>, vector<1x16xf32>, vector<1x16xf32> -> vector<1x256xf32>
    %84 = vector.broadcast %83 : vector<1x256xf32> to vector<4x256xf32>
    %85 = arith.mulf %1, %84 : vector<4x256xf32>
    %c0_9 = arith.constant 0 : index
    %c0_10 = arith.constant 0 : index
    %c0_11 = arith.constant 0 : index
    %86 = vector.load %arg3[%c0_9, %c0_10, %c0_11] : memref<1x4x256xf32, #tpu.memory_space<vmem>>, vector<1x4x256xf32>
    %87 = vector.shape_cast %86 : vector<1x4x256xf32> to vector<4x256xf32>
    %88 = vector.shape_cast %85 : vector<4x256xf32> to vector<1x4x256xf32>
    tpu.vector_store %arg3[%c0_9, %c0_10, %c0_11], %88 {strides = array<i32>} : memref<1x4x256xf32, #tpu.memory_space<vmem>>, vector<1x4x256xf32>,
    return
  }
  func.func @transform_0(%arg0: i32) -> (i32, i32, i32) {
    %c0_i32 = arith.constant 0 : i32
    %c0_i32_0 = arith.constant 0 : i32
    %c0_i32_1 = arith.constant 0 : i32
    return %arg0, %c0_i32, %c0_i32_0 : i32, i32, i32
  }
  func.func @transform_1(%arg0: i32) -> (i32, i32) {
    %c0_i32 = arith.constant 0 : i32
    %c0_i32_0 = arith.constant 0 : i32
    %c0_i32_1 = arith.constant 0 : i32
    return %c0_i32, %c0_i32_0 : i32, i32
  }
  func.func @transform_2(%arg0: i32) -> (i32, i32, i32) {
    %c0_i32 = arith.constant 0 : i32
    %c0_i32_0 = arith.constant 0 : i32
    %c0_i32_1 = arith.constant 0 : i32
    return %arg0, %c0_i32, %c0_i32_0 : i32, i32, i32
  }
}

</mosaic_0001>

<llo_original>
// kernel: sam_pallas.1
$region0: #{sam_pallas.1}
  #allocation0 [shape = 'u32[]', space=smem, size = 0x4, offset = 0x4, fixed_abs, tag = 'smem constant byte address 0x4 - core index']
  #allocation1 [shape = 'u32[72,128]{1,0:T(1,128)}', space=vmem, size = 0x9000, scoped, tag = 'internal scratch']
  %s0 = inlined_call_operand.vmem [shape: f32[2,4,256], index: 0, kind: input, shape index: {}]
  %s1 = inlined_call_operand.vmem [shape: f32[224,16], index: 1, kind: input, shape index: {}]
  %s2 = inlined_call_operand.vmem [shape: f32[2,4,256], index: 2, kind: output, shape index: {}]
  %s3 = sld [smem:[#allocation0]]
  $region41: #{sam_pallas.1} parent=0
    _
  %s5 = ssub.s32 1, %s3
  %s6 = scalar_select 0, %s5, %s3
  loop: start=0, step=1, limit=4
  $region2: #{sam_pallas.1} parent=0 // loop_pre_header
    _
  $region3: #{sam_pallas.1} parent=0 // loop_header
    %s8 = sphi 0, %s12
    %p9 = scmp.ge.s32.totalorder %s8, 4
    %s18 = sphi 0, %s20
    %s21 = sphi 0, %s18
    %s22 = sphi 0, %s21
    %s38 = sphi 0, %s22
    %s42 = sphi 0, %s42
    %s44 = sphi 0, %s42
    %s45 = sphi 0, %s44
    %s59 = sphi 0, %s45
    %s65 = sphi 0, %s67
    %s68 = sphi 0, %s65
    %s69 = sphi 0, %s68
    %s85 = sphi 0, %s69
  $region4: #{sam_pallas.1} parent=0 // loop_header_branch
    %11 = sbr.rel (%p9) target = $region8
  $region5: #{sam_pallas.1} parent=0 // loop_body
    %s13 = ssub.s32 %s8, 1
    %s14 = ssub.s32 %s8, 2
    %s15 = sadd.s32 %s8, 1
    %s16 = ssub.s32 %s8, %s15
    %p17 = scmp.eq.s32.totalorder %s16, 0
    %s19 = sadd.s32 %s18, 1
    %s20 = scalar_select %p17, %s18, %s19
    %p23 = pneg %p17
    %p24 = scmp.eq.s32.totalorder %s8, 1
    %p25 = por %p23, %p24
    %p26 = scmp.ne.s32.totalorder %s18, %s21
    %p27 = scmp.eq.s32.totalorder %s8, 0
    %p28 = por %p26, %p27
    %p29 = scmp.ne.s32.totalorder %s18, %s21
    %p30 = scmp.eq.s32.totalorder %s13, 1
    %p31 = por %p29, %p30
    %p32 = scmp.ne.s32.totalorder %s21, %s22
    %p33 = scmp.eq.s32.totalorder %s13, 0
    %p34 = por %p32, %p33
    %p35 = scmp.ne.s32.totalorder %s21, %s22
    %p36 = scmp.eq.s32.totalorder %s14, 1
    %p37 = por %p35, %p36
    %p39 = scmp.ne.s32.totalorder %s22, %s38
    %p40 = scmp.eq.s32.totalorder %s14, 0
    %p41 = por %p39, %p40
    %s43 = sadd.s32 %s42, 1
    %p46 = scmp.eq.s32.totalorder %s8, 1
    %p47 = scmp.ne.s32.totalorder %s42, %s44
    %p48 = scmp.eq.s32.totalorder %s8, 0
    %p49 = por %p47, %p48
    %p50 = scmp.ne.s32.totalorder %s42, %s44
    %p51 = scmp.eq.s32.totalorder %s13, 1
    %p52 = por %p50, %p51
    %p53 = scmp.ne.s32.totalorder %s44, %s45
    %p54 = scmp.eq.s32.totalorder %s13, 0
    %p55 = por %p53, %p54
    %p56 = scmp.ne.s32.totalorder %s44, %s45
    %p57 = scmp.eq.s32.totalorder %s14, 1
    %p58 = por %p56, %p57
    %p60 = scmp.ne.s32.totalorder %s45, %s59
    %p61 = scmp.eq.s32.totalorder %s14, 0
    %p62 = por %p60, %p61
    %s63 = ssub.s32 %s8, %s15
    %p64 = scmp.eq.s32.totalorder %s63, 0
    %s66 = sadd.s32 %s65, 1
    %s67 = scalar_select %p64, %s65, %s66
    %p70 = pneg %p64
    %p71 = scmp.eq.s32.totalorder %s8, 1
    %p72 = por %p70, %p71
    %p73 = scmp.ne.s32.totalorder %s65, %s68
    %p74 = scmp.eq.s32.totalorder %s8, 0
    %p75 = por %p73, %p74
    %p76 = scmp.ne.s32.totalorder %s65, %s68
    %p77 = scmp.eq.s32.totalorder %s13, 1
    %p78 = por %p76, %p77
    %p79 = scmp.ne.s32.totalorder %s68, %s69
    %p80 = scmp.eq.s32.totalorder %s13, 0
    %p81 = por %p79, %p80
    %p82 = scmp.ne.s32.totalorder %s68, %s69
    %p83 = scmp.eq.s32.totalorder %s14, 1
    %p84 = por %p82, %p83
    %p86 = scmp.ne.s32.totalorder %s69, %s85
    %p87 = scmp.eq.s32.totalorder %s14, 0
    %p88 = por %p86, %p87
    %p89 = scmp.le.s32.totalorder 1, %s8
    %p90 = scmp.lt.s32.totalorder %s8, 3
    %p91 = pnand %p89, %p90
    %p92 = pneg %p91
    // Predicated region
    $region9: #{sam_pallas.1} parent=5 // pred_check
      _
    $region10: #{sam_pallas.1} parent=5 // pred_check_branch
      %94 = sbr.rel (%p91) target = $region12
    $region11: #{sam_pallas.1} parent=5 // pred_region
      %s95 = ssub.s32 %s8, 1
      // Predicated region
      $region13: #{sam_pallas.1} parent=11 // pred_check
        %p96 = pneg %p55
      $region14: #{sam_pallas.1} parent=11 // pred_check_branch
        %98 = sbr.rel (%p96) target = $region16
      $region15: #{sam_pallas.1} parent=11 // pred_region
        _
      $region16: #{sam_pallas.1} parent=11 // pred_fallthru
        _
    $region12: #{sam_pallas.1} parent=5 // pred_fallthru
      _
    %p99 = scmp.lt.s32.totalorder %s8, 2
    // Predicated region
    $region17: #{sam_pallas.1} parent=5 // pred_check
      %p100 = pneg %p99
    $region18: #{sam_pallas.1} parent=5 // pred_check_branch
      %102 = sbr.rel (%p100) target = $region20
    $region19: #{sam_pallas.1} parent=5 // pred_region
      // Predicated region
      $region21: #{sam_pallas.1} parent=19 // pred_check
        %p103 = pneg %p28
      $region22: #{sam_pallas.1} parent=19 // pred_check_branch
        %105 = sbr.rel (%p103) target = $region24
      $region23: #{sam_pallas.1} parent=19 // pred_region
        %p106 = scmp.lt.s32.totalorder %s8, 1
        %s107 = scalar_select %p106, %s8, 1
        %s108 = smul.addr %s107, 2
        %s109 = smul.addr %s108, 4
        %s110 = scalar_lea.vmem %s0, %s109
      $region24: #{sam_pallas.1} parent=19 // pred_fallthru
        _
    $region20: #{sam_pallas.1} parent=5 // pred_fallthru
      _
    %p111 = scmp.le.s32.totalorder 1, %s8
    %p112 = scmp.lt.s32.totalorder %s8, 3
    %p113 = pnand %p111, %p112
    %p114 = pneg %p113
    // Predicated region
    $region25: #{sam_pallas.1} parent=5 // pred_check
      _
    $region26: #{sam_pallas.1} parent=5 // pred_check_branch
      %116 = sbr.rel (%p113) target = $region28
    $region27: #{sam_pallas.1} parent=5 // pred_region
      %s117 = ssub.s32 %s8, 1
      %p118 = scmp.lt.s32.totalorder %s13, 1
      %s119 = scalar_select %p118, %s13, 1
      %s120 = smul.addr %s119, 2
      %s121 = smul.addr %s120, 4
      %s122 = scalar_lea.vmem %s0, %s121
      %p123 = pneg %p34
      %p124 = pneg %p31
      %p125 = pneg %p55
      %p126 = pneg %p52
      %p127 = pneg %p81
      %p128 = pneg %p78
      %p129 = scmp.lt.s32.totalorder %s13, 1
      %s130 = scalar_select %p129, %s13, 1
      %s131 = smul.addr %s130, 2
      %s132 = smul.addr %s131, 4
      %s133 = scalar_lea.vmem %s2, %s132
      %p134 = scmp.lt.s32.totalorder %s13, 1
      %s135 = scalar_select %p134, %s13, 1
      %s136 = smul.addr %s135, 2
      %s137 = smul.addr %s136, 4
      %s138 = scalar_lea.vmem %s0, %s137
      %p139 = scmp.lt.s32.totalorder %s13, 1
      %s140 = scalar_select %p139, %s13, 1
      %s141 = smul.addr %s140, 2
      %s142 = smul.addr %s141, 4
      %s143 = scalar_lea.vmem %s2, %s142
      %v144 = vld [vmem:[%s138] sm:$0xff]
      %146 = vst [vmem:[#allocation1] ss:$2 sm:$0xff] %v144
      %v147 = vld.sshfl [vmem:[#allocation1] sm:$0xff pattern:$0x75316420]
      %v148 = vld.sshfl [vmem:[#allocation1 + $0x8] sm:$0xff pattern:$0x75316420]
      %vm151 = vcmask 1043456
      %v152 = vsel %vm151, %v147, -inf
      %v153 = vrot.slane %v152, 4
      %v154 = vmax.f32 %v152, %v153
      %v155 = vrot.slane %v154, 2
      %v156 = vmax.f32 %v154, %v155
      %v157 = vrot.slane %v156, 1
      %v158 = vmax.f32 %v156, %v157
      %v159 = vsel %vm151, %v148, -inf
      %v160 = vrot.slane %v159, 4
      %v161 = vmax.f32 %v159, %v160
      %v162 = vrot.slane %v161, 2
      %v163 = vmax.f32 %v161, %v162
      %v164 = vrot.slane %v163, 1
      %v165 = vmax.f32 %v163, %v164
      %166 = vst [vmem:[#allocation1] ss:$2 sm:$0xff] %v144
      %v167 = vld.sshfl [vmem:[#allocation1] sm:$0xff pattern:$0x75316420]
      %v168 = vld.sshfl [vmem:[#allocation1 + $0x8] sm:$0xff pattern:$0x75316420]
      %v171 = vsel %vm151, %v167, 0.0
      %v172 = vrot.slane %v171, 4
      %v173 = vadd.f32 %v171, %v172
      %v174 = vrot.slane %v173, 2
      %v175 = vadd.f32 %v173, %v174
      %v176 = vrot.slane %v175, 1
      %v177 = vadd.f32 %v175, %v176
      %v178 = vsel %vm151, %v168, 0.0
      %v179 = vrot.slane %v178, 4
      %v180 = vadd.f32 %v178, %v179
      %v181 = vrot.slane %v180, 2
      %v182 = vadd.f32 %v180, %v181
      %v183 = vrot.slane %v182, 1
      %v184 = vadd.f32 %v182, %v183
      %v185 = vmul.f32 %v177, 0.25
      %v186 = vmul.f32 %v184, 0.25
      %v187 = vld [vmem:[%s1] sm:$0xff]
      %v188 = vld [vmem:[%s1 + $0x8] sm:$0xff]
      %v189 = vld [vmem:[%s1 + $0x10] sm:$0xff]
      %v190 = vld [vmem:[%s1 + $0x18] sm:$0xff]
      %v191 = vld [vmem:[%s1 + $0x20] sm:$0xff]
      %v192 = vld [vmem:[%s1 + $0x28] sm:$0xff]
      %v193 = vld [vmem:[%s1 + $0x30] sm:$0xff]
      %v194 = vld [vmem:[%s1 + $0x38] sm:$0xff]
      %v195 = vld [vmem:[%s1 + $0x40] sm:$0xff]
      %v196 = vld [vmem:[%s1 + $0x48] sm:$0xff]
      %v197 = vld [vmem:[%s1 + $0x50] sm:$0xff]
      %v198 = vld [vmem:[%s1 + $0x58] sm:$0xff]
      %v199 = vld [vmem:[%s1 + $0x60] sm:$0xff]
      %v200 = vld [vmem:[%s1 + $0x68] sm:$0xff]
      %v201 = vld [vmem:[%s1 + $0x70] sm:$0xff]
      %v202 = vld [vmem:[%s1 + $0x78] sm:$0xff]
      %v203 = vld [vmem:[%s1 + $0x80] sm:$0xff]
      %v204 = vld [vmem:[%s1 + $0x88] sm:$0xff]
      %v205 = vld [vmem:[%s1 + $0x90] sm:$0xff]
      %v206 = vld [vmem:[%s1 + $0x98] sm:$0xff]
      %v207 = vld [vmem:[%s1 + $0xa0] sm:$0xff]
      %v208 = vld [vmem:[%s1 + $0xa8] sm:$0xff]
      %v209 = vld [vmem:[%s1 + $0xb0] sm:$0xff]
      %v210 = vld [vmem:[%s1 + $0xb8] sm:$0xff]
      %v211 = vld [vmem:[%s1 + $0xc0] sm:$0xff]
      %v212 = vld [vmem:[%s1 + $0xc8] sm:$0xff]
      %v213 = vld [vmem:[%s1 + $0xd0] sm:$0xff]
      %v214 = vld [vmem:[%s1 + $0xd8] sm:$0xff]
      %216 = vrot.lane.b32.xlu0 %v158, 112
      %v217 = vpop.permute.xlu0 %216
      %219 = vrot.lane.b32.xlu0 %v158, 96
      %v220 = vpop.permute.xlu0 %219
      %222 = vrot.lane.b32.xlu0 %v158, 80
      %v223 = vpop.permute.xlu0 %222
      %225 = vrot.lane.b32.xlu0 %v158, 64
      %v226 = vpop.permute.xlu0 %225
      %228 = vrot.lane.b32.xlu0 %v158, 48
      %v229 = vpop.permute.xlu0 %228
      %231 = vrot.lane.b32.xlu0 %v158, 32
      %v232 = vpop.permute.xlu0 %231
      %234 = vrot.lane.b32.xlu0 %v158, 16
      %v235 = vpop.permute.xlu0 %234
      %238 = vrot.lane.b32.xlu0 %v165, 112
      %v239 = vpop.permute.xlu0 %238
      %241 = vrot.lane.b32.xlu0 %v165, 96
      %v242 = vpop.permute.xlu0 %241
      %244 = vrot.lane.b32.xlu0 %v165, 80
      %v245 = vpop.permute.xlu0 %244
      %247 = vrot.lane.b32.xlu0 %v165, 64
      %v248 = vpop.permute.xlu0 %247
      %250 = vrot.lane.b32.xlu0 %v165, 48
      %v251 = vpop.permute.xlu0 %250
      %253 = vrot.lane.b32.xlu0 %v165, 32
      %v254 = vpop.permute.xlu0 %253
      %256 = vrot.lane.b32.xlu0 %v165, 16
      %v257 = vpop.permute.xlu0 %256
      %vm259 = vcmask 1040384
      %v260 = vsel %vm259, %v158, %v217
      %vm261 = vcmask 1041408
      %v262 = vsel %vm261, %v260, %v220
      %vm263 = vcmask 1042432
      %v264 = vsel %vm263, %v262, %v223
      %v265 = vsel %vm151, %v264, %v226
      %vm266 = vcmask 1044480
      %v267 = vsel %vm266, %v265, %v229
      %vm268 = vcmask 1045504
      %v269 = vsel %vm268, %v267, %v232
      %vm270 = vcmask 1046528
      %v271 = vsel %vm270, %v269, %v235
      %v272 = vsel %vm259, %v165, %v239
      %v273 = vsel %vm261, %v272, %v242
      %v274 = vsel %vm263, %v273, %v245
      %v275 = vsel %vm151, %v274, %v248
      %v276 = vsel %vm266, %v275, %v251
      %v277 = vsel %vm268, %v276, %v254
      %v278 = vsel %vm270, %v277, %v257
      %v281 = vrot.slane %v271, 5
      %v282 = vrot.slane %v278, 5
      %v283 = vsel %vm263, %v281, %v282
      %v287 = vsel %vm263, 0.0, %v281
      %v288 = vsel %vm263, %v282, 0.0
      %290 = vrot.lane.b32.xlu0 %v185, 112
      %v291 = vpop.permute.xlu0 %290
      %293 = vrot.lane.b32.xlu0 %v185, 96
      %v294 = vpop.permute.xlu0 %293
      %296 = vrot.lane.b32.xlu0 %v185, 80
      %v297 = vpop.permute.xlu0 %296
      %299 = vrot.lane.b32.xlu0 %v185, 64
      %v300 = vpop.permute.xlu0 %299
      %302 = vrot.lane.b32.xlu0 %v185, 48
      %v303 = vpop.permute.xlu0 %302
      %305 = vrot.lane.b32.xlu0 %v185, 32
      %v306 = vpop.permute.xlu0 %305
      %308 = vrot.lane.b32.xlu0 %v185, 16
      %v309 = vpop.permute.xlu0 %308
      %312 = vrot.lane.b32.xlu0 %v186, 112
      %v313 = vpop.permute.xlu0 %312
      %315 = vrot.lane.b32.xlu0 %v186, 96
      %v316 = vpop.permute.xlu0 %315
      %318 = vrot.lane.b32.xlu0 %v186, 80
      %v319 = vpop.permute.xlu0 %318
      %321 = vrot.lane.b32.xlu0 %v186, 64
      %v322 = vpop.permute.xlu0 %321
      %324 = vrot.lane.b32.xlu0 %v186, 48
      %v325 = vpop.permute.xlu0 %324
      %327 = vrot.lane.b32.xlu0 %v186, 32
      %v328 = vpop.permute.xlu0 %327
      %330 = vrot.lane.b32.xlu0 %v186, 16
      %v331 = vpop.permute.xlu0 %330
      %v333 = vsel %vm259, %v185, %v291
      %v334 = vsel %vm261, %v333, %v294
      %v335 = vsel %vm263, %v334, %v297
      %v336 = vsel %vm151, %v335, %v300
      %v337 = vsel %vm266, %v336, %v303
      %v338 = vsel %vm268, %v337, %v306
      %v339 = vsel %vm270, %v338, %v309
      %v340 = vsel %vm259, %v186, %v313
      %v341 = vsel %vm261, %v340, %v316
      %v342 = vsel %vm263, %v341, %v319
      %v343 = vsel %vm151, %v342, %v322
      %v344 = vsel %vm266, %v343, %v325
      %v345 = vsel %vm268, %v344, %v328
      %v346 = vsel %vm270, %v345, %v331
      %v349 = vrot.slane %v339, 5
      %v350 = vrot.slane %v346, 5
      %v351 = vsel %vm263, %v349, %v350
      %v354 = vsel %vm263, 0.0, %v349
      %v355 = vsel %vm263, %v350, 0.0
      %v358 = vrot.slane %v287, 1
      %v359 = vrot.slane %v283, 1
      %v360 = vsel %vm270, %v358, %v359
      %v361 = vrot.slane %v288, 1
      %v362 = vsel %vm270, %v359, %v361
      %363 = vrot.lane.b32.xlu0 %v360, 16
      %v364 = vpop.permute.xlu0 %363
      %365 = vrot.lane.b32.xlu0 %v362, 16
      %v366 = vpop.permute.xlu0 %365
      %v369 = vrot.slane %v287, 2
      %v370 = vrot.slane %v283, 2
      %v371 = vsel %vm268, %v369, %v370
      %v372 = vrot.slane %v288, 2
      %v373 = vsel %vm268, %v370, %v372
      %374 = vrot.lane.b32.xlu0 %v371, 32
      %v375 = vpop.permute.xlu0 %374
      %376 = vrot.lane.b32.xlu0 %v373, 32
      %v377 = vpop.permute.xlu0 %376
      %v380 = vrot.slane %v287, 3
      %v381 = vrot.slane %v283, 3
      %v382 = vsel %vm266, %v380, %v381
      %v383 = vrot.slane %v288, 3
      %v384 = vsel %vm266, %v381, %v383
      %385 = vrot.lane.b32.xlu0 %v382, 48
      %v386 = vpop.permute.xlu0 %385
      %387 = vrot.lane.b32.xlu0 %v384, 48
      %v388 = vpop.permute.xlu0 %387
      %v391 = vrot.slane %v287, 4
      %v392 = vrot.slane %v283, 4
      %v393 = vsel %vm151, %v391, %v392
      %v394 = vrot.slane %v288, 4
      %v395 = vsel %vm151, %v392, %v394
      %396 = vrot.lane.b32.xlu0 %v393, 64
      %v397 = vpop.permute.xlu0 %396
      %398 = vrot.lane.b32.xlu0 %v395, 64
      %v399 = vpop.permute.xlu0 %398
      %v402 = vrot.slane %v287, 5
      %v403 = vrot.slane %v283, 5
      %v404 = vsel %vm263, %v402, %v403
      %v405 = vrot.slane %v288, 5
      %v406 = vsel %vm263, %v403, %v405
      %407 = vrot.lane.b32.xlu0 %v404, 80
      %v408 = vpop.permute.xlu0 %407
      %409 = vrot.lane.b32.xlu0 %v406, 80
      %v410 = vpop.permute.xlu0 %409
      %v413 = vrot.slane %v287, 6
      %v414 = vrot.slane %v283, 6
      %v415 = vsel %vm261, %v413, %v414
      %v416 = vrot.slane %v288, 6
      %v417 = vsel %vm261, %v414, %v416
      %418 = vrot.lane.b32.xlu0 %v415, 96
      %v419 = vpop.permute.xlu0 %418
      %420 = vrot.lane.b32.xlu0 %v417, 96
      %v421 = vpop.permute.xlu0 %420
      %425 = vrot.lane.b32.xlu0 %v354, 112
      %v426 = vpop.permute.xlu0 %425
      %427 = vrot.lane.b32.xlu0 %v351, 112
      %v428 = vpop.permute.xlu0 %427
      %v432 = vrot.slane %v354, 1
      %v433 = vrot.slane %v351, 1
      %v434 = vsel %vm270, %v432, %v433
      %v435 = vrot.slane %v355, 1
      %v436 = vsel %vm270, %v433, %v435
      %v439 = vrot.slane %v354, 2
      %v440 = vrot.slane %v351, 2
      %v441 = vsel %vm268, %v439, %v440
      %v442 = vrot.slane %v355, 2
      %v443 = vsel %vm268, %v440, %v442
      %444 = vrot.lane.b32.xlu0 %v441, 16
      %v445 = vpop.permute.xlu0 %444
      %446 = vrot.lane.b32.xlu0 %v443, 16
      %v447 = vpop.permute.xlu0 %446
      %v450 = vrot.slane %v354, 3
      %v451 = vrot.slane %v351, 3
      %v452 = vsel %vm266, %v450, %v451
      %v453 = vrot.slane %v355, 3
      %v454 = vsel %vm266, %v451, %v453
      %455 = vrot.lane.b32.xlu0 %v452, 32
      %v456 = vpop.permute.xlu0 %455
      %457 = vrot.lane.b32.xlu0 %v454, 32
      %v458 = vpop.permute.xlu0 %457
      %v461 = vrot.slane %v354, 4
      %v462 = vrot.slane %v351, 4
      %v463 = vsel %vm151, %v461, %v462
      %v464 = vrot.slane %v355, 4
      %v465 = vsel %vm151, %v462, %v464
      %466 = vrot.lane.b32.xlu0 %v463, 48
      %v467 = vpop.permute.xlu0 %466
      %468 = vrot.lane.b32.xlu0 %v465, 48
      %v469 = vpop.permute.xlu0 %468
      %v472 = vrot.slane %v354, 5
      %v473 = vrot.slane %v351, 5
      %v474 = vsel %vm263, %v472, %v473
      %v475 = vrot.slane %v355, 5
      %v476 = vsel %vm263, %v473, %v475
      %477 = vrot.lane.b32.xlu0 %v474, 64
      %v478 = vpop.permute.xlu0 %477
      %479 = vrot.lane.b32.xlu0 %v476, 64
      %v480 = vpop.permute.xlu0 %479
      %v483 = vrot.slane %v354, 6
      %v484 = vrot.slane %v351, 6
      %v485 = vsel %vm261, %v483, %v484
      %v486 = vrot.slane %v355, 6
      %v487 = vsel %vm261, %v484, %v486
      %488 = vrot.lane.b32.xlu0 %v485, 80
      %v489 = vpop.permute.xlu0 %488
      %490 = vrot.lane.b32.xlu0 %v487, 80
      %v491 = vpop.permute.xlu0 %490
      %vm494 = vcmask 130048
      %v495 = vsel %vm494, %v287, %v364
      %v496 = vsel %vm494, %v283, %v366
      %vm497 = vcmask 261120
      %v498 = vsel %vm497, %v495, %v375
      %v499 = vsel %vm497, %v496, %v377
      %vm500 = vcmask 392192
      %v501 = vsel %vm500, %v498, %v386
      %v502 = vsel %vm500, %v499, %v388
      %vm503 = vcmask 523264
      %v504 = vsel %vm503, %v501, %v397
      %v505 = vsel %vm503, %v502, %v399
      %vm506 = vcmask 654336
      %v507 = vsel %vm506, %v504, %v408
      %v508 = vsel %vm506, %v505, %v410
      %vm509 = vcmask 785408
      %v510 = vsel %vm509, %v507, %v419
      %v511 = vsel %vm509, %v508, %v421
      %vm512 = vcmask 916480
      %v513 = vsel %vm512, %v510, %v426
      %v514 = vsel %vm512, %v511, %v428
      %v515 = vsel %vm494, %v434, %v445
      %v516 = vsel %vm494, %v436, %v447
      %v517 = vsel %vm497, %v515, %v456
      %v518 = vsel %vm497, %v516, %v458
      %v519 = vsel %vm500, %v517, %v467
      %v520 = vsel %vm500, %v518, %v469
      %v521 = vsel %vm503, %v519, %v478
      %v522 = vsel %vm503, %v520, %v480
      %v523 = vsel %vm506, %v521, %v489
      %v524 = vsel %vm506, %v522, %v491
      %v526 = vsel %vm509, %v523, 0
      %v529 = vsel %vm509, %v524, 0
      %531 = vmatpush.msra.mxu0 %v202
      %532 = vmatpush.msra.mxu0 %v201
      %533 = vmatpush.msra.mxu0 %v200
      %534 = vmatpush.msra.mxu0 %v199
      %535 = vmatpush.msra.mxu0 %v198
      %536 = vmatpush.msra.mxu0 %v197
      %537 = vmatpush.msra.mxu0 %v196
      %538 = vmatpush.msra.mxu0 %v195
      %539 = vmatpush.msra.mxu0 %v194
      %540 = vmatpush.msra.mxu0 %v193
      %541 = vmatpush.msra.mxu0 %v192
      %542 = vmatpush.msra.mxu0 %v191
      %543 = vmatpush.msra.mxu0 %v190
      %544 = vmatpush.msra.mxu0 %v189
      %545 = vmatpush.msra.mxu0 %v188
      %546 = vmatpush.msra.mxu0 %v187
      %547 = vmatmul.f32.gmra.mxu0 %v513
      %v548 = vpop.f32.mrf.mxu0
      %v549 = vadd.f32 0.0, %v548
      %550 = vmatmul.f32.gmra.mxu0 %v514
      %v551 = vpop.f32.mrf.mxu0
      %v552 = vadd.f32 0.0, %v551
      %553 = vdwg.mxu0
      %554 = vmatpush.msra.mxu0 0.0
      %555 = vmatpush.msra.mxu0 0.0
      %556 = vmatpush.msra.mxu0 0.0
      %557 = vmatpush.msra.mxu0 0.0
      %558 = vmatpush.msra.mxu0 %v214
      %559 = vmatpush.msra.mxu0 %v213
      %560 = vmatpush.msra.mxu0 %v212
      %561 = vmatpush.msra.mxu0 %v211
      %562 = vmatpush.msra.mxu0 %v210
      %563 = vmatpush.msra.mxu0 %v209
      %564 = vmatpush.msra.mxu0 %v208
      %565 = vmatpush.msra.mxu0 %v207
      %566 = vmatpush.msra.mxu0 %v206
      %567 = vmatpush.msra.mxu0 %v205
      %568 = vmatpush.msra.mxu0 %v204
      %569 = vmatpush.msra.mxu0 %v203
      %570 = vmatmul.f32.gmra.mxu0 %v526
      %v571 = vpop.f32.mrf.mxu0
      %v572 = vadd.f32 %v549, %v571
      %573 = vmatmul.f32.gmra.mxu0 %v529
      %v574 = vpop.f32.mrf.mxu0
      %v575 = vadd.f32 %v552, %v574
      %576 = vdwg.mxu0
      %v577 = vxor.u32 %v572, 2147483648
      %v578 = vxor.u32 %v575, 2147483648
      %v579 = vmul.f32 %v577, 1.442695
      %v580 = vpow.pop %v579
      %v581 = vmul.f32 %v578, 1.442695
      %v582 = vpow.pop %v581
      %v583 = vadd.f32 %v580, 1.0
      %v584 = vadd.f32 %v582, 1.0
      %v585 = vrcp.pop %v583
      %v586 = vmul.f32 %v583, %v585
      %v587 = vsub.f32 1.0, %v586
      %v588 = vmul.f32 %v585, %v587
      %v589 = vadd.f32 %v585, %v588
      %vm590 = vweird.f32 %v583
      %vm591 = vweird.f32 %v585
      %vm592 = vmor %vm590, %vm591
      %v593 = vsel %vm592, %v585, %v589
      %v594 = vand.u32 2147483647, %v583
      %vm595 = vcmp.eq.f32.partialorder %v594, 8.507059e+37
      %v596 = vand.u32 %v583, 2147483648
      %v597 = vor.u32 1.1754944e-38, %v596
      %v598 = vsel %vm595, %v597, %v593
      %v599 = vmul.f32 1.0, %v598
      %v600 = vrcp.pop %v584
      %v601 = vmul.f32 %v584, %v600
      %v602 = vsub.f32 1.0, %v601
      %v603 = vmul.f32 %v600, %v602
      %v604 = vadd.f32 %v600, %v603
      %vm605 = vweird.f32 %v584
      %vm606 = vweird.f32 %v600
      %vm607 = vmor %vm605, %vm606
      %v608 = vsel %vm607, %v600, %v604
      %v609 = vand.u32 2147483647, %v584
      %vm610 = vcmp.eq.f32.partialorder %v609, 8.507059e+37
      %v611 = vand.u32 %v584, 2147483648
      %v612 = vor.u32 1.1754944e-38, %v611
      %v613 = vsel %vm610, %v612, %v608
      %v614 = vmul.f32 1.0, %v613
      %v616 = vrot.slane %v599, 1
      %617 = vrot.lane.b32.xlu0 %v616, 16
      %v618 = vpop.permute.xlu0 %617
      %v620 = vrot.slane %v599, 2
      %621 = vrot.lane.b32.xlu0 %v620, 32
      %v622 = vpop.permute.xlu0 %621
      %v624 = vrot.slane %v599, 3
      %625 = vrot.lane.b32.xlu0 %v624, 48
      %v626 = vpop.permute.xlu0 %625
      %v628 = vrot.slane %v599, 4
      %629 = vrot.lane.b32.xlu0 %v628, 64
      %v630 = vpop.permute.xlu0 %629
      %v632 = vrot.slane %v599, 5
      %633 = vrot.lane.b32.xlu0 %v632, 80
      %v634 = vpop.permute.xlu0 %633
      %v636 = vrot.slane %v599, 6
      %637 = vrot.lane.b32.xlu0 %v636, 96
      %v638 = vpop.permute.xlu0 %637
      %v640 = vrot.slane %v599, 7
      %641 = vrot.lane.b32.xlu0 %v640, 112
      %v642 = vpop.permute.xlu0 %641
      %v645 = vrot.slane %v614, 1
      %646 = vrot.lane.b32.xlu0 %v645, 16
      %v647 = vpop.permute.xlu0 %646
      %v649 = vrot.slane %v614, 2
      %650 = vrot.lane.b32.xlu0 %v649, 32
      %v651 = vpop.permute.xlu0 %650
      %v653 = vrot.slane %v614, 3
      %654 = vrot.lane.b32.xlu0 %v653, 48
      %v655 = vpop.permute.xlu0 %654
      %v657 = vrot.slane %v614, 4
      %658 = vrot.lane.b32.xlu0 %v657, 64
      %v659 = vpop.permute.xlu0 %658
      %v661 = vrot.slane %v614, 5
      %662 = vrot.lane.b32.xlu0 %v661, 80
      %v663 = vpop.permute.xlu0 %662
      %v665 = vrot.slane %v614, 6
      %666 = vrot.lane.b32.xlu0 %v665, 96
      %v667 = vpop.permute.xlu0 %666
      %v669 = vrot.slane %v614, 7
      %670 = vrot.lane.b32.xlu0 %v669, 112
      %v671 = vpop.permute.xlu0 %670
      %v673 = vsel %vm494, %v599, %v618
      %v674 = vsel %vm497, %v673, %v622
      %v675 = vsel %vm500, %v674, %v626
      %v676 = vsel %vm503, %v675, %v630
      %v677 = vsel %vm506, %v676, %v634
      %v678 = vsel %vm509, %v677, %v638
      %v679 = vsel %vm512, %v678, %v642
      %v680 = vsel %vm494, %v614, %v647
      %v681 = vsel %vm497, %v680, %v651
      %v682 = vsel %vm500, %v681, %v655
      %v683 = vsel %vm503, %v682, %v659
      %v684 = vsel %vm506, %v683, %v663
      %v685 = vsel %vm509, %v684, %v667
      %v686 = vsel %vm512, %v685, %v671
      %v687 = vperm.slane %v679, 0
      %v688 = vperm.slane %v686, 0
      %v691 = vrot.slane %v688, 4
      %v692 = vsel %vm151, %v687, %v691
      %v694 = vmul.f32 %v144, %v692
      %695 = vst [vmem:[%s143] sm:$0xff] %v694
      %p696 = scmp.lt.s32.totalorder %s13, 1
      %s697 = scalar_select %p696, %s13, 1
      %s698 = smul.addr %s697, 2
      %s699 = smul.addr %s698, 4
      %s700 = scalar_lea.vmem %s2, %s699
      // Predicated region
      $region29: #{sam_pallas.1} parent=27 // pred_check
        %p701 = pneg %p78
      $region30: #{sam_pallas.1} parent=27 // pred_check_branch
        %703 = sbr.rel (%p701) target = $region32
      $region31: #{sam_pallas.1} parent=27 // pred_region
        _
      $region32: #{sam_pallas.1} parent=27 // pred_fallthru
        _
    $region28: #{sam_pallas.1} parent=5 // pred_fallthru
      _
    %p704 = scmp.le.s32.totalorder 2, %s8
    // Predicated region
    $region33: #{sam_pallas.1} parent=5 // pred_check
      %p705 = pneg %p704
    $region34: #{sam_pallas.1} parent=5 // pred_check_branch
      %707 = sbr.rel (%p705) target = $region36
    $region35: #{sam_pallas.1} parent=5 // pred_region
      %s708 = ssub.s32 %s8, 2
      // Predicated region
      $region37: #{sam_pallas.1} parent=35 // pred_check
        %p709 = pneg %p84
      $region38: #{sam_pallas.1} parent=35 // pred_check_branch
        %711 = sbr.rel (%p709) target = $region40
      $region39: #{sam_pallas.1} parent=35 // pred_region
        %p712 = scmp.lt.s32.totalorder %s14, 1
        %s713 = scalar_select %p712, %s14, 1
        %s714 = smul.addr %s713, 2
        %s715 = smul.addr %s714, 4
        %s716 = scalar_lea.vmem %s2, %s715
      $region40: #{sam_pallas.1} parent=35 // pred_fallthru
        _
    $region36: #{sam_pallas.1} parent=5 // pred_fallthru
      _
  $region6: #{sam_pallas.1} parent=0 // loop_footer
    %s12 = sadd.s32 1, %s8
  $region7: #{sam_pallas.1} parent=0 // loop_footer_branch
    %7 = sbr.rel target = $region3
  $region8: #{sam_pallas.1} parent=0 // loop_exit
    _

</llo_original>
